<compile_context>
chip_gen: v6e
topology: v6e:2x2x1
jax: 0.10.0
libtpu: 0.0.40
codegen_flags: <defaults>
</compile_context>

<pallas_src>
import functools
import math

import jax
import jax.numpy as jnp
from jax.experimental import pallas as pl
from jax.experimental.pallas import tpu as pltpu


# ----------------------------------------------------------------------------- kernel

def _alpha_dropout_kernel(x_ref, m_ref, o_ref, *, block_rows, mask_resident):
    if mask_resident:
        # m_ref holds the full (padded) mask column; slice this tile's rows.
        r0 = pl.multiple_of(pl.program_id(0) * block_rows, block_rows)
        m = m_ref[pl.ds(r0, block_rows), :]
    else:
        m = m_ref[...]                              # (block_rows, 1)
    # Clamp / dtype handling is hoisted to the wrapper; this is a pure multiply.
    o_ref[...] = (x_ref[...] * m).astype(o_ref.dtype)


# ----------------------------------------------------------------------------- helpers

def _round_up(n, m):
    return ((n + m - 1) // m) * m


def _choose_flatten(shape):
    """Return (R, L): reshape x to (R, L) with L lane-dense (multiple of 128) if possible."""
    ndim = len(shape)
    for k in range(2, ndim):                        # largest suffix first
        L = int(math.prod(shape[k:]))
        if L >= 128 and L % 128 == 0:
            return int(math.prod(shape[:k])), L
    L = int(math.prod(shape[2:])) if ndim > 2 else 1
    return int(shape[0] * shape[1]), max(L, 1)


def _choose_tiles(R, L, itemsize, target_bytes):
    """Budget-driven (block_rows, lane_block); grid uses cdiv with partial edge blocks."""
    pack = {4: 8, 2: 16, 1: 32}.get(itemsize, 8)    # sublane packing per dtype width
    # Lane tile: whole row if one packed row-group fits the budget, else the
    # largest multiple of 128 under the budget (partial edge block is fine).
    if L <= 128:
        lane_block = L                              # full extent (always legal)
    else:
        max_lanes = max(128, target_bytes // (pack * itemsize))
        lane_block = min(L, (max_lanes // 128) * 128)
    # Row tile: as many rows as the budget allows, multiple of the packing factor,
    # or the full extent if everything fits.
    row_budget = max(pack, target_bytes // max(1, lane_block * itemsize))
    if row_budget >= R:
        block_rows = R                              # full extent (always legal)
    else:
        block_rows = max(pack, (row_budget // pack) * pack)
    return block_rows, lane_block


# ----------------------------------------------------------------------------- wrapper

def alpha_dropout_forward(x, mask, *, active=True, pruned=False,
                          bounds=(0.05, 0.99),
                          target_tile_bytes=4 << 20,      # ~4 MiB per tile
                          min_pallas_bytes=2 << 20,       # plain-JAX below ~2 MiB
                          use_pallas=None):
    """x: (N, C, *spatial), mask: (C,).  use_pallas: None=auto, True/False=force."""
    if not active:
        return x

    N, C = int(x.shape[0]), int(x.shape[1])

    # Effective per-channel multiplier, computed once in the wrapper (clamp hoisted
    # out of the kernel; cast to x.dtype so the kernel multiply runs natively).
    m1 = mask.astype(jnp.float32)
    if not pruned:
        m1 = jnp.clip(m1, float(bounds[0]), float(bounds[1]))
    # TODO(synk): restrict_grad (custom backward masking) has no forward effect;
    #   a custom_vjp would be needed to reproduce its gradient semantics.
    if jnp.issubdtype(x.dtype, jnp.floating):
        m1 = m1.astype(x.dtype)

    R, L = _choose_flatten(x.shape)
    itemsize = jnp.dtype(x.dtype).itemsize
    total_bytes = R * L * itemsize

    if use_pallas is None:
        use_pallas = (total_bytes >= min_pallas_bytes) and (L >= 128)
    if not use_pallas:
        shape = (1, C) + (1,) * (x.ndim - 2)
        return (m1.reshape(shape) * x).astype(x.dtype)

    x2 = x.reshape(R, L)
    # Per-row mask column: each channel's value repeated over its (n, folded-spatial) rows.
    inner = R // (N * C)
    mcol = jnp.broadcast_to(m1.reshape(1, C, 1), (N, C, inner)).reshape(R, 1)
    mask_itemsize = jnp.dtype(mcol.dtype).itemsize

    block_rows, lane_block = _choose_tiles(R, L, itemsize, target_tile_bytes)
    grid_rows = pl.cdiv(R, block_rows)
    grid_lanes = pl.cdiv(L, lane_block)
    grid = (grid_rows, grid_lanes)

    # Keep the whole mask column resident in VMEM when its padded footprint is
    # small (lane dim pads to 128); otherwise stream a (block_rows, 1) block that
    # stays constant across the (innermost) lane axis, so it is never re-DMA'd.
    mask_resident = R * 128 * mask_itemsize <= (4 << 20)
    if mask_resident:
        # Pad rows so in-kernel pl.ds slicing never reads past the VMEM block.
        r_full = grid_rows * block_rows
        if r_full > R:
            mcol = jnp.pad(mcol, ((0, r_full - R), (0, 0)))
        m_spec = pl.BlockSpec((int(mcol.shape[0]), 1), lambda i, j: (0, 0))
        mask_vmem = _round_up(int(mcol.shape[0]), 8) * 128 * mask_itemsize
    else:
        m_spec = pl.BlockSpec((block_rows, 1), lambda i, j: (i, 0))
        mask_vmem = 2 * _round_up(block_rows, 8) * 128 * mask_itemsize

    # Explicit VMEM budget: double-buffered in + out tiles, mask, + headroom for
    # Mosaic internal scratch. Stays well under v7x's 64 MiB physical VMEM.
    tile_bytes = block_rows * lane_block * itemsize
    needed = 4 * tile_bytes + mask_vmem
    vmem_limit = int(min(48 << 20, max(16 << 20, needed + (6 << 20))))

    kernel = functools.partial(
        _alpha_dropout_kernel,
        block_rows=block_rows,
        mask_resident=mask_resident,
    )

    out = pl.pallas_call(
        kernel,
        out_shape=jax.ShapeDtypeStruct((R, L), x.dtype),
        grid_spec=pltpu.PrefetchScalarGridSpec(
            num_scalar_prefetch=0,
            grid=grid,
            in_specs=[
                pl.BlockSpec((block_rows, lane_block), lambda i, j: (i, j)),
                m_spec,
            ],
            out_specs=pl.BlockSpec((block_rows, lane_block), lambda i, j: (i, j)),
        ),
        compiler_params=pltpu.CompilerParams(
            # Row axis leads so v7x can shard it across both TensorCores when
            # grid_rows >= 2; lane axis innermost keeps the mask block stationary.
            dimension_semantics=("parallel", "parallel"),
            vmem_limit_bytes=vmem_limit,
        ),
    )(x2, mcol)

    return out.reshape(x.shape)


# TODO(synk): pruned path could skip HBM reads of zeroed channels via a
#   scalar-prefetched table of kept row-blocks in the x index_map (plus a
#   pl.when zero-fill for pruned output blocks); not implemented here.
# TODO(synk): prune() itself (sort + in-place parameter mutation) is host-side
#   parameter surgery, not a forward op; no kernel equivalent.


if __name__ == "__main__":
    key = jax.random.PRNGKey(0)

    N, C, H, W = 2, 4, 16, 16
    x = jax.random.normal(key, (N, C, H, W), dtype=jnp.float32)

    init = 0.1
    bounds = (0.05, 0.99)
    mask = jnp.full((C,), init, dtype=jnp.float32)

    # --- active, not pruned (clamped mask); force Pallas despite small size ---
    out = alpha_dropout_forward(x, mask, active=True, pruned=False,
                                bounds=bounds, use_pallas=True)
    out = jax.block_until_ready(out)
    ref = jnp.clip(mask, *bounds)[None, :, None, None] * x
    assert out.shape == x.shape and out.dtype == x.dtype
    assert jnp.allclose(out, ref, atol=1e-6, rtol=1e-6)

    # --- active, pruned (binary 0/1 mask, no clamp) ---
    pruned_mask = jnp.array([0.0, 1.0, 1.0, 0.0], dtype=jnp.float32)
    out_p = alpha_dropout_forward(x, pruned_mask, active=True, pruned=True,
                                  bounds=bounds, use_pallas=True)
    out_p = jax.block_until_ready(out_p)
    ref_p = pruned_mask[None, :, None, None] * x
    assert jnp.allclose(out_p, ref_p, atol=1e-6, rtol=1e-6)

    # --- inactive: identity ---
    out_i = alpha_dropout_forward(x, mask, active=False)
    assert out_i is x

    # --- multi-step row tiling + resident-mask slicing ---
    N2, C2, H2, W2 = 4, 16, 32, 32
    x_big = jax.random.normal(jax.random.PRNGKey(1), (N2, C2, H2, W2), dtype=jnp.float32)
    mask_big = jax.random.uniform(jax.random.PRNGKey(2), (C2,), dtype=jnp.float32)
    out_big = alpha_dropout_forward(x_big, mask_big, active=True, pruned=False,
                                    bounds=bounds, use_pallas=True,
                                    target_tile_bytes=64 * 1024)
    out_big = jax.block_until_ready(out_big)
    ref_big = jnp.clip(mask_big, *bounds)[None, :, None, None] * x_big
    assert jnp.allclose(out_big, ref_big, atol=1e-6, rtol=1e-6)

    # --- cdiv grid with a partial edge row block + padded resident mask ---
    N3, C3, H3, W3 = 3, 5, 24, 128
    x_odd = jax.random.normal(jax.random.PRNGKey(3), (N3, C3, H3, W3), dtype=jnp.float32)
    mask_odd = jax.random.uniform(jax.random.PRNGKey(4), (C3,), dtype=jnp.float32)
    out_odd = alpha_dropout_forward(x_odd, mask_odd, active=True, pruned=False,
                                    bounds=bounds, use_pallas=True,
                                    target_tile_bytes=32 * 1024)
    out_odd = jax.block_until_ready(out_odd)
    ref_odd = jnp.clip(mask_odd, *bounds)[None, :, None, None] * x_odd
    assert jnp.allclose(out_odd, ref_odd, atol=1e-6, rtol=1e-6)

    # --- bf16 input: native-dtype multiply path ---
    x_bf = jax.random.normal(jax.random.PRNGKey(5), (2, 8, 16, 128), dtype=jnp.bfloat16)
    mask_bf = jax.random.uniform(jax.random.PRNGKey(6), (8,), dtype=jnp.float32)
    out_bf = alpha_dropout_forward(x_bf, mask_bf, active=True, pruned=False,
                                   bounds=bounds, use_pallas=True)
    out_bf = jax.block_until_ready(out_bf)
    m_bf = jnp.clip(mask_bf, *bounds).astype(jnp.bfloat16)
    ref_bf = (m_bf[None, :, None, None] * x_bf).astype(jnp.bfloat16)
    assert out_bf.dtype == jnp.bfloat16
    assert jnp.allclose(out_bf.astype(jnp.float32), ref_bf.astype(jnp.float32),
                        atol=1e-2, rtol=2e-2)

    # --- small-input auto path (plain JAX fallback) ---
    out_auto = jax.block_until_ready(alpha_dropout_forward(x, mask, active=True))
    assert jnp.allclose(out_auto, ref, atol=1e-6, rtol=1e-6)

    print("KERNEL_OK")
</pallas_src>

<mosaic_0001>
module attributes {stable_mosaic.version = 11 : i64} {
  func.func @_alpha_dropout_kernel(%arg0: i32, %arg1: i32, %arg2: memref<8x256xf32, #tpu.memory_space<vmem>>, %arg3: memref<8x1xf32, #tpu.memory_space<vmem>>, %arg4: memref<8x256xf32, #tpu.memory_space<vmem>>) attributes {dimension_semantics = [#tpu.dimension_semantics<parallel>, #tpu.dimension_semantics<parallel>], iteration_bounds = array<i64: 1, 1>, scalar_prefetch = 0 : i64, scratch_operands = 0 : i64, tpu.core_type = #tpu.core_type<tc>, window_params = [{transform_indices = @transform_0, window_bounds = array<i64: 8, 256>}, {pipeline_mode = #tpu.pipeline_mode<synchronous>, transform_indices = @transform_1, window_bounds = array<i64: 8, 1>}, {transform_indices = @transform_2, window_bounds = array<i64: 8, 256>}]} {
    %c8_i32 = arith.constant 8 : i32
    %0 = arith.muli %arg0, %c8_i32 : i32
    %1 = tpu.assume_multiple %0, 8 : i32
    %2 = arith.index_cast %1 : i32 to index
    %c0 = arith.constant 0 : index
    %3 = vector.load %arg3[%2, %c0] : memref<8x1xf32, #tpu.memory_space<vmem>>, vector<8x1xf32>
    %c0_0 = arith.constant 0 : index
    %c0_1 = arith.constant 0 : index
    %4 = vector.load %arg2[%c0_0, %c0_1] : memref<8x256xf32, #tpu.memory_space<vmem>>, vector<8x256xf32>
    %5 = vector.broadcast %3 : vector<8x1xf32> to vector<8x256xf32>
    %6 = arith.mulf %4, %5 : vector<8x256xf32>
    %c0_2 = arith.constant 0 : index
    %c0_3 = arith.constant 0 : index
    %7 = vector.load %arg4[%c0_2, %c0_3] : memref<8x256xf32, #tpu.memory_space<vmem>>, vector<8x256xf32>
    tpu.vector_store %arg4[%c0_2, %c0_3], %6 {strides = array<i32>} : memref<8x256xf32, #tpu.memory_space<vmem>>, vector<8x256xf32>,
    return
  }
  func.func @transform_0(%arg0: i32, %arg1: i32) -> (i32, i32) {
    %c0_i32 = arith.constant 0 : i32
    return %arg0, %arg1 : i32, i32
  }
  func.func @transform_1(%arg0: i32, %arg1: i32) -> (i32, i32) {
    %c0_i32 = arith.constant 0 : i32
    %c0_i32_0 = arith.constant 0 : i32
    %c0_i32_1 = arith.constant 0 : i32
    return %c0_i32, %c0_i32_0 : i32, i32
  }
  func.func @transform_2(%arg0: i32, %arg1: i32) -> (i32, i32) {
    %c0_i32 = arith.constant 0 : i32
    return %arg0, %arg1 : i32, i32
  }
}

</mosaic_0001>

<llo_original>
// kernel: tpu_custom_call.1
$region0: #{tpu_custom_call.1}
  #allocation0 [shape = 'u32[]', space=smem, size = 0x4, offset = 0x4, fixed_abs, tag = 'smem constant byte address 0x4 - core index']
  #allocation1 [shape = 'u32[144,128]{1,0:T(1,128)}', space=vmem, size = 0x12000, scoped, tag = 'internal scratch']
  %s0 = inlined_call_operand.hbm [shape: f32[8,256], index: 0, kind: input, shape index: {}]
  %s1 = inlined_call_operand.vmem [shape: f32[8,1], index: 1, kind: input, shape index: {}]
  %s2 = inlined_call_operand.hbm [shape: f32[8,256], index: 2, kind: output, shape index: {}]
  %s3 = sld [smem:[#allocation0]]
  $region22: #{tpu_custom_call.1} parent=0
    _
  %s5 = ssub.s32 1, %s3
  %s6 = scalar_select 0, %s5, %s3
  $region1: #{tpu_custom_call.1} parent=0
    #allocation2 [shape = 'u8[8192]{0}', space=vmem, size = 0x2000, scoped, tag = 'input window, operand 0, single buffered']
    #allocation3 [shape = 's32[1]{0}', space=sflag, size = 0x4, scoped, tag = 'scoped memory for tpu_custom_call.1']
    #allocation4 [shape = 's32[1]{0}', space=sflag, size = 0x4, scoped, tag = 'scoped memory for tpu_custom_call.1']
    #allocation5 [shape = 'u8[8192]{0}', space=vmem, size = 0x2000, scoped, tag = 'output window, operand 0, single buffered']
    %7 = vsyncpa [#allocation3], 0
    %8 = vsyncpa [#allocation4], 0
    // Predicated region
    $region2: #{tpu_custom_call.1} parent=1 // pred_check
      _
    $region3: #{tpu_custom_call.1} parent=1 // pred_check_branch
      %10 = sbr.rel (0) target = $region5
    $region4: #{tpu_custom_call.1} parent=1 // pred_region
      %s12 = ssub.s32 256, 256
      %13 = vsyncadd [#allocation3], %s12
      %s15 = sshll.u32 [#allocation2], 4
      %s16 = int_to_ptr.vmem [resolvable:$true] %s15
      %18 = dma.hbm_to_vmem [thread:$0]  %s0, 256, %s16, [#allocation3]
    $region5: #{tpu_custom_call.1} parent=1 // pred_fallthru
      _
    // Predicated region
    $region6: #{tpu_custom_call.1} parent=1 // pred_check
      _
    $region7: #{tpu_custom_call.1} parent=1 // pred_check_branch
      %20 = sbr.rel (0) target = $region9
    $region8: #{tpu_custom_call.1} parent=1 // pred_region
      _
    $region9: #{tpu_custom_call.1} parent=1 // pred_fallthru
      _
    // Predicated region
    $region10: #{tpu_custom_call.1} parent=1 // pred_check
      _
    $region11: #{tpu_custom_call.1} parent=1 // pred_check_branch
      %22 = sbr.rel (0) target = $region13
    $region12: #{tpu_custom_call.1} parent=1 // pred_region
      %23 = dma.done [#allocation3], 256
    $region13: #{tpu_custom_call.1} parent=1 // pred_fallthru
      _
    %s24 = smul.u32 0, 8
    %s25 = scalar_lea.vmem %s1, %s24
    %v26 = vld [vmem:[%s25] sm:$0xff]
    %v27 = vld [vmem:[#allocation2] sm:$0xff]
    %v28 = vld [vmem:[#allocation2 + $0x8] sm:$0xff]
    %30 = vset.pattern.permute.xlu0 0
    %31 = vperm.xlu0 %30, %v26
    %v32 = vpop.permute.xlu0 %31
    %v34 = vmul.f32 %v27, %v32
    %v35 = vmul.f32 %v28, %v32
    %36 = vst [vmem:[#allocation5] sm:$0xff] %v34
    %37 = vst [vmem:[#allocation5 + $0x8] sm:$0xff] %v35
    // Predicated region
    $region14: #{tpu_custom_call.1} parent=1 // pred_check
      _
    $region15: #{tpu_custom_call.1} parent=1 // pred_check_branch
      %39 = sbr.rel (0) target = $region17
    $region16: #{tpu_custom_call.1} parent=1 // pred_region
      %s41 = ssub.s32 256, 256
      %42 = vsyncadd [#allocation4], %s41
      %s44 = sshll.u32 [#allocation5], 4
      %s45 = int_to_ptr.vmem [resolvable:$true] %s44
      %47 = dma.vmem_to_hbm [thread:$0]  %s45, 256, %s2, [#allocation4]
    $region17: #{tpu_custom_call.1} parent=1 // pred_fallthru
      _
    // Predicated region
    $region18: #{tpu_custom_call.1} parent=1 // pred_check
      _
    $region19: #{tpu_custom_call.1} parent=1 // pred_check_branch
      %49 = sbr.rel (0) target = $region21
    $region20: #{tpu_custom_call.1} parent=1 // pred_region
      %50 = dma.done [#allocation4], 256
    $region21: #{tpu_custom_call.1} parent=1 // pred_fallthru
      _
    %51 = vsyncpa [#allocation3], 1
    %52 = vsyncpa [#allocation4], 1

</llo_original>
